<compile_context>
chip_gen: v7x
topology: tpu7x:2x2x1
jax: 0.10.0
libtpu: 0.0.40
codegen_flags: <defaults>
</compile_context>

<pallas_src>
import jax
import jax.numpy as jnp
from jax.experimental import pallas as pl
from jax.experimental.pallas import tpu as pltpu

_LANES = 128
_SUBLANES = 8
_TM_MAX = 2048          # absolute row-tile cap (>=512 rows is already ~85% of HBM roofline)
_NEG_BIG = -1e30        # padded-class bias; must stay f32 (see prepare_mlp_params)


def _round_up(x, m):
    return (x + m - 1) // m * m


def _mlp_kernel(x_ref, w1_ref, b1_ref, w2_ref, b2_ref, o_ref):
    # fc1 + ReLU (MXU, f32 accumulation). Padded in_dim columns of x are zero and the
    # matching rows of w1 are zero, so they contribute nothing.
    h = jnp.dot(x_ref[...], w1_ref[...], preferred_element_type=jnp.float32)
    h = jnp.maximum(h + b1_ref[...], 0.0)

    # fc2 (1/T already folded into w2/b2 at prep time). Padded hid columns are exactly 0;
    # padded class columns pick up a -1e30 f32 bias and drop out of the log_softmax.
    logits = jnp.dot(h.astype(w2_ref.dtype), w2_ref[...],
                     preferred_element_type=jnp.float32)
    logits = logits + b2_ref[...]

    # log_softmax over the lane-padded class axis (strictly row-wise -> safe with the
    # ragged last row tile, whose out-of-bounds rows are discarded on store).
    m = jnp.max(logits, axis=1, keepdims=True)
    shifted = logits - m
    lse = jnp.log(jnp.sum(jnp.exp(shifted), axis=1, keepdims=True))
    o_ref[...] = (shifted - lse).astype(o_ref.dtype)


def prepare_mlp_params(w1, b1, w2, b2, T=1.0, compute_dtype=jnp.bfloat16):
    """One-time weight prep (do NOT redo per forward call):
       - transpose PyTorch (out,in) weights to (in,out),
       - zero-pad in_dim/hid_dim and pad out_dim to 128-lane multiples,
       - fold the 1/T softmax temperature into fc2,
       - cast MXU operands to compute_dtype; biases stay f32 (invariant: the -1e30
         padded-class bias must never be narrowed)."""
    hid_dim, in_dim = w1.shape
    out_dim = w2.shape[0]
    in_pad = _round_up(in_dim, _LANES)
    hid_pad = _round_up(hid_dim, _LANES)
    out_pad = _round_up(out_dim, _LANES)
    scale = 1.0 / float(T)

    w1_t = jnp.asarray(w1, jnp.float32).T                                    # [in, hid]
    w1_t = jnp.pad(w1_t, ((0, in_pad - in_dim), (0, hid_pad - hid_dim)))
    w1_t = w1_t.astype(compute_dtype)
    b1_2d = jnp.pad(jnp.asarray(b1, jnp.float32).reshape(1, hid_dim),
                    ((0, 0), (0, hid_pad - hid_dim)))                         # [1, hid_pad] f32

    w2_t = jnp.asarray(w2, jnp.float32).T * scale                             # [hid, out]
    w2_t = jnp.pad(w2_t, ((0, hid_pad - hid_dim), (0, out_pad - out_dim)))
    w2_t = w2_t.astype(compute_dtype)
    b2_2d = jnp.pad(jnp.asarray(b2, jnp.float32).reshape(1, out_dim) * scale,
                    ((0, 0), (0, out_pad - out_dim)), constant_values=_NEG_BIG)
    assert b2_2d.dtype == jnp.float32     # -1e30 padding must stay f32

    # TODO(synk): optional fp8 weight storage on v7x (bf16 x fp8 MXU) for very large dims.
    return dict(w1_t=w1_t, b1=b1_2d, w2_t=w2_t, b2=b2_2d,
                in_dim=in_dim, hid_dim=hid_dim, out_dim=out_dim,
                in_pad=in_pad, hid_pad=hid_pad, out_pad=out_pad,
                compute_dtype=compute_dtype)


def _vmem_budget_bytes():
    """Generation-aware VMEM budget for sizing the row tile."""
    cap = 64 << 20                            # conservative default = v7x per-TC physical VMEM
    try:
        cap = int(pltpu.get_tpu_info().vmem_capacity_bytes)
    except Exception:
        pass
    return min(cap // 2, 40 << 20), cap


def _choose_tm(n, in_pad, hid_pad, out_pad, cdt_size, out_size, budget):
    # Per-step VMEM footprint model: double-buffered x/out tiles, f32 h/logits
    # intermediates, weights counted worst-case double-buffered (fallback path).
    weight_bytes = 2 * (in_pad * hid_pad * cdt_size + hid_pad * 4
                        + hid_pad * out_pad * cdt_size + out_pad * 4)
    per_row = (2 * in_pad * cdt_size          # x tile (double-buffered)
               + 2 * out_pad * out_size       # out tile (double-buffered)
               + hid_pad * 4                  # h (f32)
               + out_pad * 4)                 # logits (f32)
    avail = max(budget - weight_bytes, per_row * _SUBLANES)
    tm_vmem = max(_SUBLANES, (avail // per_row) // _SUBLANES * _SUBLANES)
    tm_cap = max(_SUBLANES, min(_TM_MAX, tm_vmem))

    steps = pl.cdiv(n, tm_cap)
    if n > _SUBLANES:
        steps = max(steps, 2)                 # >=2 grid steps: v7x's 2nd TensorCore gets work
    return _round_up(pl.cdiv(n, steps), _SUBLANES)   # minimal row padding for this step count


def mlp_forward(x, params, tm=None, out_dtype=jnp.float32, slice_output=True):
    """x: [N, in_dim]. Returns log_softmax(fc2(relu(fc1(x))) / T, dim=1).
       out_dtype=jnp.bfloat16 + slice_output=False is the low-HBM-traffic fast path
       (returns the [N, out_pad] padded slab)."""
    n, in_dim = x.shape
    assert in_dim == params["in_dim"]
    in_pad, hid_pad, out_pad = params["in_pad"], params["hid_pad"], params["out_pad"]
    out_dim = params["out_dim"]
    cdt = params["compute_dtype"]

    budget, vmem_cap = _vmem_budget_bytes()
    cdt_size = jnp.dtype(cdt).itemsize
    out_size = jnp.dtype(out_dtype).itemsize
    if tm is None:
        tm = _choose_tm(n, in_pad, hid_pad, out_pad, cdt_size, out_size, budget)
    else:
        tm = _round_up(min(tm, _TM_MAX), _SUBLANES)
    num_steps = pl.cdiv(n, tm)                # ragged last block; no row-padding pass over x

    # Only wrapper pass over x: fused cast + lane-pad of in_dim (skipped when the caller
    # already supplies lane-aligned data in the compute dtype).
    x_p = x if x.dtype == cdt else x.astype(cdt)
    if in_pad != in_dim:
        x_p = jnp.pad(x_p, ((0, 0), (0, in_pad - in_dim)))

    vmem_limit = int(min(vmem_cap, budget + (8 << 20)))

    def run(const_mode):
        def const(shape):
            if const_mode is None:
                return pl.BlockSpec(shape, lambda i: (0, 0))
            return pl.BlockSpec(shape, lambda i: (0, 0), pipeline_mode=const_mode)

        return pl.pallas_call(
            _mlp_kernel,
            out_shape=jax.ShapeDtypeStruct((n, out_pad), out_dtype),
            grid=(num_steps,),
            in_specs=[
                pl.BlockSpec((tm, in_pad), lambda i: (i, 0)),   # x: streamed over rows
                const((in_pad, hid_pad)),                       # weights/biases: resident
                const((1, hid_pad)),
                const((hid_pad, out_pad)),
                const((1, out_pad)),
            ],
            out_specs=pl.BlockSpec((tm, out_pad), lambda i: (i, 0)),  # lane-dense output slab
            compiler_params=pltpu.CompilerParams(
                dimension_semantics=("parallel",),              # rows split across TCs (v7x)
                vmem_limit_bytes=vmem_limit),
        )(x_p, params["w1_t"], params["b1"], params["w2_t"], params["b2"])

    try:
        # Constant index_map -> weights fetched once; a single buffer halves their VMEM.
        out = run(pl.Buffered(1))
    except Exception:
        out = run(None)                        # fallback if Buffered(1) is unsupported

    if slice_output:
        return out[:, :out_dim]
    return out


if __name__ == "__main__":
    # N deliberately not a tile multiple to exercise the ragged last row block.
    N, IN_DIM, HID_DIM, OUT_DIM = 27, 16, 32, 10

    key = jax.random.PRNGKey(0)
    kx, kw1, kb1, kw2, kb2 = jax.random.split(key, 5)

    x = jax.random.normal(kx, (N, IN_DIM), dtype=jnp.float32)
    # PyTorch nn.Linear stores weight as [out, in].
    w1 = jax.random.normal(kw1, (HID_DIM, IN_DIM), dtype=jnp.float32) * 0.1
    b1 = jax.random.normal(kb1, (HID_DIM,), dtype=jnp.float32) * 0.1
    w2 = jax.random.normal(kw2, (OUT_DIM, HID_DIM), dtype=jnp.float32) * 0.1
    b2 = jax.random.normal(kb2, (OUT_DIM,), dtype=jnp.float32) * 0.1

    def reference(x, T=1.0):
        h = jnp.maximum(x @ w1.T + b1, 0.0)
        return jax.nn.log_softmax((h @ w2.T + b2) / T, axis=1)

    ref = reference(x)

    # 1) f32 compute path, forced tm=8 -> 4-step ragged pipelined grid; tight tolerance.
    p32 = prepare_mlp_params(w1, b1, w2, b2, T=1.0, compute_dtype=jnp.float32)
    o1 = jax.block_until_ready(mlp_forward(x, p32, tm=8))
    assert o1.shape == (N, OUT_DIM)
    assert jnp.allclose(o1, ref, atol=1e-5, rtol=1e-5), "f32 path mismatch vs reference"

    # 2) Default fast compute path: bf16 MXU operands, f32 accumulation, auto tm.
    pbf = prepare_mlp_params(w1, b1, w2, b2, T=1.0)   # compute_dtype=bf16
    o2 = jax.block_until_ready(mlp_forward(x, pbf))
    assert o2.shape == (N, OUT_DIM)
    assert jnp.allclose(o2, ref, atol=3e-2, rtol=3e-2), "bf16 path mismatch vs reference"

    # 3) Temperature T != 1 (folded into fc2 at prep time).
    refT = reference(x, T=2.0)
    pT = prepare_mlp_params(w1, b1, w2, b2, T=2.0, compute_dtype=jnp.float32)
    o3 = jax.block_until_ready(mlp_forward(x, pT))
    assert jnp.allclose(o3, refT, atol=1e-5, rtol=1e-5), "T=2 path mismatch vs reference"

    # 4) Low-HBM-traffic output path: bf16 padded slab, no wrapper slice pass.
    o4 = jax.block_until_ready(
        mlp_forward(x, p32, out_dtype=jnp.bfloat16, slice_output=False))
    assert o4.shape == (N, p32["out_pad"]) and o4.dtype == jnp.bfloat16
    assert jnp.allclose(o4[:, :OUT_DIM].astype(jnp.float32), ref, atol=3e-2, rtol=3e-2), \
        "bf16-output path mismatch vs reference"

    print("KERNEL_OK")
</pallas_src>

<mosaic_0001>
module attributes {stable_mosaic.version = 11 : i64} {
  func.func @_mlp_kernel(%arg0: i32, %arg1: memref<8x128xf32, #tpu.memory_space<vmem>>, %arg2: memref<128x128xf32, #tpu.memory_space<vmem>>, %arg3: memref<1x128xf32, #tpu.memory_space<vmem>>, %arg4: memref<128x128xf32, #tpu.memory_space<vmem>>, %arg5: memref<1x128xf32, #tpu.memory_space<vmem>>, %arg6: memref<8x128xf32, #tpu.memory_space<vmem>>) attributes {dimension_semantics = [#tpu.dimension_semantics<parallel>], iteration_bounds = array<i64: 4>, scalar_prefetch = 0 : i64, scratch_operands = 0 : i64, tpu.core_type = #tpu.core_type<tc>, window_params = [{transform_indices = @transform_0, window_bounds = array<i64: 8, 128>}, {pipeline_mode = #tpu.pipeline_mode<synchronous>, transform_indices = @transform_1, window_bounds = array<i64: 128, 128>}, {pipeline_mode = #tpu.pipeline_mode<synchronous>, transform_indices = @transform_2, window_bounds = array<i64: 1, 128>}, {pipeline_mode = #tpu.pipeline_mode<synchronous>, transform_indices = @transform_3, window_bounds = array<i64: 128, 128>}, {pipeline_mode = #tpu.pipeline_mode<synchronous>, transform_indices = @transform_4, window_bounds = array<i64: 1, 128>}, {transform_indices = @transform_5, window_bounds = array<i64: 8, 128>}]} {
    %c0 = arith.constant 0 : index
    %c0_0 = arith.constant 0 : index
    %0 = vector.load %arg1[%c0, %c0_0] : memref<8x128xf32, #tpu.memory_space<vmem>>, vector<8x128xf32>
    %c0_1 = arith.constant 0 : index
    %c0_2 = arith.constant 0 : index
    %1 = vector.load %arg2[%c0_1, %c0_2] : memref<128x128xf32, #tpu.memory_space<vmem>>, vector<128x128xf32>
    %cst = arith.constant dense<0.000000e+00> : vector<8x128xf32>
    %2 = tpu.matmul %0, %1, %cst {dimension_numbers = #tpu.dot_dimension_numbers<[1], [0], [0], [1], [0, 0, 1, 1], [], []>} : vector<8x128xf32>, vector<128x128xf32>, vector<8x128xf32> -> vector<8x128xf32>
    %c0_3 = arith.constant 0 : index
    %c0_4 = arith.constant 0 : index
    %3 = vector.load %arg3[%c0_3, %c0_4] : memref<1x128xf32, #tpu.memory_space<vmem>>, vector<1x128xf32>
    %4 = vector.broadcast %3 : vector<1x128xf32> to vector<8x128xf32>
    %5 = arith.addf %2, %4 : vector<8x128xf32>
    %cst_5 = arith.constant 0.000000e+00 : f32
    %6 = vector.broadcast %cst_5 : f32 to vector<8x128xf32>
    %7 = arith.maximumf %5, %6 : vector<8x128xf32>
    %c0_6 = arith.constant 0 : index
    %c0_7 = arith.constant 0 : index
    %8 = vector.load %arg4[%c0_6, %c0_7] : memref<128x128xf32, #tpu.memory_space<vmem>>, vector<128x128xf32>
    %cst_8 = arith.constant dense<0.000000e+00> : vector<8x128xf32>
    %9 = tpu.matmul %7, %8, %cst_8 {dimension_numbers = #tpu.dot_dimension_numbers<[1], [0], [0], [1], [0, 0, 1, 1], [], []>} : vector<8x128xf32>, vector<128x128xf32>, vector<8x128xf32> -> vector<8x128xf32>
    %c0_9 = arith.constant 0 : index
    %c0_10 = arith.constant 0 : index
    %10 = vector.load %arg5[%c0_9, %c0_10] : memref<1x128xf32, #tpu.memory_space<vmem>>, vector<1x128xf32>
    %11 = vector.broadcast %10 : vector<1x128xf32> to vector<8x128xf32>
    %12 = arith.addf %9, %11 : vector<8x128xf32>
    %cst_11 = arith.constant dense<0xFF800000> : vector<8xf32>
    %13 = vector.multi_reduction <maximumf>, %12, %cst_11 [1] : vector<8x128xf32> to vector<8xf32>
    %14 = vector.shape_cast %13 : vector<8xf32> to vector<8x1xf32>
    %15 = vector.broadcast %14 : vector<8x1xf32> to vector<8x128xf32>
    %16 = arith.subf %12, %15 : vector<8x128xf32>
    %17 = math.exp %16 : vector<8x128xf32>
    %cst_12 = arith.constant dense<0.000000e+00> : vector<8xf32>
    %18 = vector.multi_reduction <add>, %17, %cst_12 [1] : vector<8x128xf32> to vector<8xf32>
    %19 = vector.shape_cast %18 : vector<8xf32> to vector<8x1xf32>
    %20 = math.log %19 : vector<8x1xf32>
    %21 = vector.broadcast %20 : vector<8x1xf32> to vector<8x128xf32>
    %22 = arith.subf %16, %21 : vector<8x128xf32>
    %c0_13 = arith.constant 0 : index
    %c0_14 = arith.constant 0 : index
    %23 = vector.load %arg6[%c0_13, %c0_14] : memref<8x128xf32, #tpu.memory_space<vmem>>, vector<8x128xf32>
    tpu.vector_store %arg6[%c0_13, %c0_14], %22 {strides = array<i32>} : memref<8x128xf32, #tpu.memory_space<vmem>>, vector<8x128xf32>,
    return
  }
  func.func @transform_0(%arg0: i32) -> (i32, i32) {
    %c0_i32 = arith.constant 0 : i32
    %c0_i32_0 = arith.constant 0 : i32
    return %arg0, %c0_i32 : i32, i32
  }
  func.func @transform_1(%arg0: i32) -> (i32, i32) {
    %c0_i32 = arith.constant 0 : i32
    %c0_i32_0 = arith.constant 0 : i32
    %c0_i32_1 = arith.constant 0 : i32
    return %c0_i32, %c0_i32_0 : i32, i32
  }
  func.func @transform_2(%arg0: i32) -> (i32, i32) {
    %c0_i32 = arith.constant 0 : i32
    %c0_i32_0 = arith.constant 0 : i32
    %c0_i32_1 = arith.constant 0 : i32
    return %c0_i32, %c0_i32_0 : i32, i32
  }
  func.func @transform_3(%arg0: i32) -> (i32, i32) {
    %c0_i32 = arith.constant 0 : i32
    %c0_i32_0 = arith.constant 0 : i32
    %c0_i32_1 = arith.constant 0 : i32
    return %c0_i32, %c0_i32_0 : i32, i32
  }
  func.func @transform_4(%arg0: i32) -> (i32, i32) {
    %c0_i32 = arith.constant 0 : i32
    %c0_i32_0 = arith.constant 0 : i32
    %c0_i32_1 = arith.constant 0 : i32
    return %c0_i32, %c0_i32_0 : i32, i32
  }
  func.func @transform_5(%arg0: i32) -> (i32, i32) {
    %c0_i32 = arith.constant 0 : i32
    %c0_i32_0 = arith.constant 0 : i32
    return %arg0, %c0_i32 : i32, i32
  }
}

module attributes {stable_mosaic.version = 11 : i64} {
  func.func @_mlp_kernel(%arg0: i32, %arg1: memref<8x128xf32, #tpu.memory_space<vmem>>, %arg2: memref<128x128xf32, #tpu.memory_space<vmem>>, %arg3: memref<1x128xf32, #tpu.memory_space<vmem>>, %arg4: memref<128x128xf32, #tpu.memory_space<vmem>>, %arg5: memref<1x128xf32, #tpu.memory_space<vmem>>, %arg6: memref<8x128xf32, #tpu.memory_space<vmem>>) attributes {dimension_semantics = [#tpu.dimension_semantics<parallel>], iteration_bounds = array<i64: 4>, scalar_prefetch = 0 : i64, scratch_operands = 0 : i64, tpu.core_type = #tpu.core_type<tc>, window_params = [{transform_indices = @transform_0, window_bounds = array<i64: 8, 128>}, {pipeline_mode = #tpu.pipeline_mode<synchronous>, transform_indices = @transform_1, window_bounds = array<i64: 128, 128>}, {pipeline_mode = #tpu.pipeline_mode<synchronous>, transform_indices = @transform_2, window_bounds = array<i64: 1, 128>}, {pipeline_mode = #tpu.pipeline_mode<synchronous>, transform_indices = @transform_3, window_bounds = array<i64: 128, 128>}, {pipeline_mode = #tpu.pipeline_mode<synchronous>, transform_indices = @transform_4, window_bounds = array<i64: 1, 128>}, {transform_indices = @transform_5, window_bounds = array<i64: 8, 128>}]} {
    %c0 = arith.constant 0 : index
    %c0_0 = arith.constant 0 : index
    %0 = vector.load %arg1[%c0, %c0_0] : memref<8x128xf32, #tpu.memory_space<vmem>>, vector<8x128xf32>
    %c0_1 = arith.constant 0 : index
    %c0_2 = arith.constant 0 : index
    %1 = vector.load %arg2[%c0_1, %c0_2] : memref<128x128xf32, #tpu.memory_space<vmem>>, vector<128x128xf32>
    %cst = arith.constant dense<0.000000e+00> : vector<8x128xf32>
    %2 = tpu.matmul %0, %1, %cst {dimension_numbers = #tpu.dot_dimension_numbers<[1], [0], [0], [1], [0, 0, 1, 1], [], []>} : vector<8x128xf32>, vector<128x128xf32>, vector<8x128xf32> -> vector<8x128xf32>
    %c0_3 = arith.constant 0 : index
    %c0_4 = arith.constant 0 : index
    %3 = vector.load %arg3[%c0_3, %c0_4] : memref<1x128xf32, #tpu.memory_space<vmem>>, vector<1x128xf32>
    %4 = vector.broadcast %3 : vector<1x128xf32> to vector<8x128xf32>
    %5 = arith.addf %2, %4 : vector<8x128xf32>
    %cst_5 = arith.constant 0.000000e+00 : f32
    %6 = vector.broadcast %cst_5 : f32 to vector<8x128xf32>
    %7 = arith.maximumf %5, %6 : vector<8x128xf32>
    %c0_6 = arith.constant 0 : index
    %c0_7 = arith.constant 0 : index
    %8 = vector.load %arg4[%c0_6, %c0_7] : memref<128x128xf32, #tpu.memory_space<vmem>>, vector<128x128xf32>
    %cst_8 = arith.constant dense<0.000000e+00> : vector<8x128xf32>
    %9 = tpu.matmul %7, %8, %cst_8 {dimension_numbers = #tpu.dot_dimension_numbers<[1], [0], [0], [1], [0, 0, 1, 1], [], []>} : vector<8x128xf32>, vector<128x128xf32>, vector<8x128xf32> -> vector<8x128xf32>
    %c0_9 = arith.constant 0 : index
    %c0_10 = arith.constant 0 : index
    %10 = vector.load %arg5[%c0_9, %c0_10] : memref<1x128xf32, #tpu.memory_space<vmem>>, vector<1x128xf32>
    %11 = vector.broadcast %10 : vector<1x128xf32> to vector<8x128xf32>
    %12 = arith.addf %9, %11 : vector<8x128xf32>
    %cst_11 = arith.constant dense<0xFF800000> : vector<8xf32>
    %13 = vector.multi_reduction <maximumf>, %12, %cst_11 [1] : vector<8x128xf32> to vector<8xf32>
    %14 = vector.shape_cast %13 : vector<8xf32> to vector<8x1xf32>
    %15 = vector.broadcast %14 : vector<8x1xf32> to vector<8x128xf32>
    %16 = arith.subf %12, %15 : vector<8x128xf32>
    %17 = math.exp %16 : vector<8x128xf32>
    %cst_12 = arith.constant dense<0.000000e+00> : vector<8xf32>
    %18 = vector.multi_reduction <add>, %17, %cst_12 [1] : vector<8x128xf32> to vector<8xf32>
    %19 = vector.shape_cast %18 : vector<8xf32> to vector<8x1xf32>
    %20 = math.log %19 : vector<8x1xf32>
    %21 = vector.broadcast %20 : vector<8x1xf32> to vector<8x128xf32>
    %22 = arith.subf %16, %21 : vector<8x128xf32>
    %c0_13 = arith.constant 0 : index
    %c0_14 = arith.constant 0 : index
    %23 = vector.load %arg6[%c0_13, %c0_14] : memref<8x128xf32, #tpu.memory_space<vmem>>, vector<8x128xf32>
    tpu.vector_store %arg6[%c0_13, %c0_14], %22 {strides = array<i32>} : memref<8x128xf32, #tpu.memory_space<vmem>>, vector<8x128xf32>,
    return
  }
  func.func @transform_0(%arg0: i32) -> (i32, i32) {
    %c0_i32 = arith.constant 0 : i32
    %c0_i32_0 = arith.constant 0 : i32
    return %arg0, %c0_i32 : i32, i32
  }
  func.func @transform_1(%arg0: i32) -> (i32, i32) {
    %c0_i32 = arith.constant 0 : i32
    %c0_i32_0 = arith.constant 0 : i32
    %c0_i32_1 = arith.constant 0 : i32
    return %c0_i32, %c0_i32_0 : i32, i32
  }
  func.func @transform_2(%arg0: i32) -> (i32, i32) {
    %c0_i32 = arith.constant 0 : i32
    %c0_i32_0 = arith.constant 0 : i32
    %c0_i32_1 = arith.constant 0 : i32
    return %c0_i32, %c0_i32_0 : i32, i32
  }
  func.func @transform_3(%arg0: i32) -> (i32, i32) {
    %c0_i32 = arith.constant 0 : i32
    %c0_i32_0 = arith.constant 0 : i32
    %c0_i32_1 = arith.constant 0 : i32
    return %c0_i32, %c0_i32_0 : i32, i32
  }
  func.func @transform_4(%arg0: i32) -> (i32, i32) {
    %c0_i32 = arith.constant 0 : i32
    %c0_i32_0 = arith.constant 0 : i32
    %c0_i32_1 = arith.constant 0 : i32
    return %c0_i32, %c0_i32_0 : i32, i32
  }
  func.func @transform_5(%arg0: i32) -> (i32, i32) {
    %c0_i32 = arith.constant 0 : i32
    %c0_i32_0 = arith.constant 0 : i32
    return %arg0, %c0_i32 : i32, i32
  }
}

</mosaic_0001>

<llo_original>
// kernel: tpu_custom_call.1
$region0: #{tpu_custom_call.1}
  #allocation0 [shape = 'u32[]', space=smem, size = 0x4, offset = 0x4, fixed_abs, tag = 'smem constant byte address 0x4 - core index']
  #allocation1 [shape = 'u32[144,128]{1,0:T(1,128)}', space=vmem, size = 0x12000, scoped, tag = 'internal scratch']
  %s0 = inlined_call_operand.hbm [shape: f32[27,128], index: 0, kind: input, shape index: {}]
  %s1 = inlined_call_operand.hbm [shape: f32[128,128], index: 1, kind: input, shape index: {}]
  %s2 = inlined_call_operand.vmem [shape: f32[1,128], index: 2, kind: input, shape index: {}]
  %s3 = inlined_call_operand.hbm [shape: f32[128,128], index: 3, kind: input, shape index: {}]
  %s4 = inlined_call_operand.vmem [shape: f32[1,128], index: 4, kind: input, shape index: {}]
  %s5 = inlined_call_operand.hbm [shape: f32[27,128], index: 5, kind: output, shape index: {}]
  %s6 = sld [smem:[#allocation0]]
  $region65: #{tpu_custom_call.1} parent=0
    _
  %s8 = ssub.s32 1, %s6
  %s9 = scalar_select 0, %s8, %s6
  $region1: #{tpu_custom_call.1} parent=0
    #allocation2 [shape = 'u8[8192]{0}', space=vmem, size = 0x2000, scoped, tag = 'input window, operand 0']
    #allocation3 [shape = 's32[2]{0}', space=sflag, size = 0x8, scoped, tag = 'scoped memory for tpu_custom_call.1']
    #allocation4 [shape = 's32[2]{0}', space=sflag, size = 0x8, scoped, tag = 'scoped memory for tpu_custom_call.1']
    #allocation5 [shape = 'u8[65536]{0}', space=vmem, size = 0x10000, scoped, tag = 'input window, operand 1, single buffered']
    #allocation6 [shape = 's32[1]{0}', space=sflag, size = 0x4, scoped, tag = 'scoped memory for tpu_custom_call.1']
    #allocation7 [shape = 'u8[65536]{0}', space=vmem, size = 0x10000, scoped, tag = 'input window, operand 3, single buffered']
    #allocation8 [shape = 'u8[8192]{0}', space=vmem, size = 0x2000, scoped, tag = 'output window, operand 0']
    %10 = vsyncpa [#allocation3], 0
    %s11 = scalar_lea.sflag [#allocation3], 1
    %12 = vsyncpa %s11, 0
    %13 = vsyncpa [#allocation6], 0
    %14 = vsyncpa [#allocation4], 0
    %s15 = scalar_lea.sflag [#allocation4], 1
    %16 = vsyncpa %s15, 0
    loop: start=0, step=1, limit=6
    $region2: #{tpu_custom_call.1} parent=1 // loop_pre_header
      _
    $region3: #{tpu_custom_call.1} parent=1 // loop_header
      %s18 = sphi 0, %s22
      %p19 = scmp.ge.s32.totalorder %s18, 6
      %s28 = sphi 0, %s30
      %s31 = sphi 0, %s28
      %s32 = sphi 0, %s31
      %s48 = sphi 0, %s32
      %s52 = sphi 0, %s52
      %s54 = sphi 0, %s52
      %s55 = sphi 0, %s54
      %s69 = sphi 0, %s55
      %s73 = sphi 0, %s73
      %s75 = sphi 0, %s73
      %s76 = sphi 0, %s75
      %s90 = sphi 0, %s76
      %s94 = sphi 0, %s94
      %s96 = sphi 0, %s94
      %s97 = sphi 0, %s96
      %s111 = sphi 0, %s97
      %s115 = sphi 0, %s115
      %s117 = sphi 0, %s115
      %s118 = sphi 0, %s117
      %s132 = sphi 0, %s118
      %s138 = sphi 0, %s140
      %s141 = sphi 0, %s138
      %s142 = sphi 0, %s141
      %s158 = sphi 0, %s142
    $region4: #{tpu_custom_call.1} parent=1 // loop_header_branch
      %21 = sbr.rel (%p19) target = $region8
    $region5: #{tpu_custom_call.1} parent=1 // loop_body
      %s23 = ssub.s32 %s18, 1
      %s24 = ssub.s32 %s18, 2
      %s25 = sadd.s32 %s18, 1
      %s26 = ssub.s32 %s18, %s25
      %p27 = scmp.eq.s32.totalorder %s26, 0
      %s29 = sadd.s32 %s28, 1
      %s30 = scalar_select %p27, %s28, %s29
      %p33 = pneg %p27
      %p34 = scmp.eq.s32.totalorder %s18, 3
      %p35 = por %p33, %p34
      %p36 = scmp.ne.s32.totalorder %s28, %s31
      %p37 = scmp.eq.s32.totalorder %s18, 0
      %p38 = por %p36, %p37
      %p39 = scmp.ne.s32.totalorder %s28, %s31
      %p40 = scmp.eq.s32.totalorder %s23, 3
      %p41 = por %p39, %p40
      %p42 = scmp.ne.s32.totalorder %s31, %s32
      %p43 = scmp.eq.s32.totalorder %s23, 0
      %p44 = por %p42, %p43
      %p45 = scmp.ne.s32.totalorder %s31, %s32
      %p46 = scmp.eq.s32.totalorder %s24, 3
      %p47 = por %p45, %p46
      %p49 = scmp.ne.s32.totalorder %s32, %s48
      %p50 = scmp.eq.s32.totalorder %s24, 0
      %p51 = por %p49, %p50
      %s53 = sadd.s32 %s52, 1
      %p56 = scmp.eq.s32.totalorder %s18, 3
      %p57 = scmp.ne.s32.totalorder %s52, %s54
      %p58 = scmp.eq.s32.totalorder %s18, 0
      %p59 = por %p57, %p58
      %p60 = scmp.ne.s32.totalorder %s52, %s54
      %p61 = scmp.eq.s32.totalorder %s23, 3
      %p62 = por %p60, %p61
      %p63 = scmp.ne.s32.totalorder %s54, %s55
      %p64 = scmp.eq.s32.totalorder %s23, 0
      %p65 = por %p63, %p64
      %p66 = scmp.ne.s32.totalorder %s54, %s55
      %p67 = scmp.eq.s32.totalorder %s24, 3
      %p68 = por %p66, %p67
      %p70 = scmp.ne.s32.totalorder %s55, %s69
      %p71 = scmp.eq.s32.totalorder %s24, 0
      %p72 = por %p70, %p71
      %s74 = sadd.s32 %s73, 1
      %p77 = scmp.eq.s32.totalorder %s18, 3
      %p78 = scmp.ne.s32.totalorder %s73, %s75
      %p79 = scmp.eq.s32.totalorder %s18, 0
      %p80 = por %p78, %p79
      %p81 = scmp.ne.s32.totalorder %s73, %s75
      %p82 = scmp.eq.s32.totalorder %s23, 3
      %p83 = por %p81, %p82
      %p84 = scmp.ne.s32.totalorder %s75, %s76
      %p85 = scmp.eq.s32.totalorder %s23, 0
      %p86 = por %p84, %p85
      %p87 = scmp.ne.s32.totalorder %s75, %s76
      %p88 = scmp.eq.s32.totalorder %s24, 3
      %p89 = por %p87, %p88
      %p91 = scmp.ne.s32.totalorder %s76, %s90
      %p92 = scmp.eq.s32.totalorder %s24, 0
      %p93 = por %p91, %p92
      %s95 = sadd.s32 %s94, 1
      %p98 = scmp.eq.s32.totalorder %s18, 3
      %p99 = scmp.ne.s32.totalorder %s94, %s96
      %p100 = scmp.eq.s32.totalorder %s18, 0
      %p101 = por %p99, %p100
      %p102 = scmp.ne.s32.totalorder %s94, %s96
      %p103 = scmp.eq.s32.totalorder %s23, 3
      %p104 = por %p102, %p103
      %p105 = scmp.ne.s32.totalorder %s96, %s97
      %p106 = scmp.eq.s32.totalorder %s23, 0
      %p107 = por %p105, %p106
      %p108 = scmp.ne.s32.totalorder %s96, %s97
      %p109 = scmp.eq.s32.totalorder %s24, 3
      %p110 = por %p108, %p109
      %p112 = scmp.ne.s32.totalorder %s97, %s111
      %p113 = scmp.eq.s32.totalorder %s24, 0
      %p114 = por %p112, %p113
      %s116 = sadd.s32 %s115, 1
      %p119 = scmp.eq.s32.totalorder %s18, 3
      %p120 = scmp.ne.s32.totalorder %s115, %s117
      %p121 = scmp.eq.s32.totalorder %s18, 0
      %p122 = por %p120, %p121
      %p123 = scmp.ne.s32.totalorder %s115, %s117
      %p124 = scmp.eq.s32.totalorder %s23, 3
      %p125 = por %p123, %p124
      %p126 = scmp.ne.s32.totalorder %s117, %s118
      %p127 = scmp.eq.s32.totalorder %s23, 0
      %p128 = por %p126, %p127
      %p129 = scmp.ne.s32.totalorder %s117, %s118
      %p130 = scmp.eq.s32.totalorder %s24, 3
      %p131 = por %p129, %p130
      %p133 = scmp.ne.s32.totalorder %s118, %s132
      %p134 = scmp.eq.s32.totalorder %s24, 0
      %p135 = por %p133, %p134
      %s136 = ssub.s32 %s18, %s25
      %p137 = scmp.eq.s32.totalorder %s136, 0
      %s139 = sadd.s32 %s138, 1
      %s140 = scalar_select %p137, %s138, %s139
      %p143 = pneg %p137
      %p144 = scmp.eq.s32.totalorder %s18, 3
      %p145 = por %p143, %p144
      %p146 = scmp.ne.s32.totalorder %s138, %s141
      %p147 = scmp.eq.s32.totalorder %s18, 0
      %p148 = por %p146, %p147
      %p149 = scmp.ne.s32.totalorder %s138, %s141
      %p150 = scmp.eq.s32.totalorder %s23, 3
      %p151 = por %p149, %p150
      %p152 = scmp.ne.s32.totalorder %s141, %s142
      %p153 = scmp.eq.s32.totalorder %s23, 0
      %p154 = por %p152, %p153
      %p155 = scmp.ne.s32.totalorder %s141, %s142
      %p156 = scmp.eq.s32.totalorder %s24, 3
      %p157 = por %p155, %p156
      %p159 = scmp.ne.s32.totalorder %s142, %s158
      %p160 = scmp.eq.s32.totalorder %s24, 0
      %p161 = por %p159, %p160
      %p162 = scmp.le.s32.totalorder 1, %s18
      %p163 = scmp.lt.s32.totalorder %s18, 5
      %p164 = pnand %p162, %p163
      %p165 = pneg %p164
      // Predicated region
      $region9: #{tpu_custom_call.1} parent=5 // pred_check
        _
      $region10: #{tpu_custom_call.1} parent=5 // pred_check_branch
        %167 = sbr.rel (%p164) target = $region12
      $region11: #{tpu_custom_call.1} parent=5 // pred_region
        %s168 = ssub.s32 %s18, 1
        // Predicated region
        $region13: #{tpu_custom_call.1} parent=11 // pred_check
          %p169 = pneg %p65
        $region14: #{tpu_custom_call.1} parent=11 // pred_check_branch
          %171 = sbr.rel (%p169) target = $region16
        $region15: #{tpu_custom_call.1} parent=11 // pred_region
          %s173 = ssub.s32 2048, 2048
          %174 = vsyncadd [#allocation6], %s173
          %s175 = sshll.u32 [#allocation5], 4
          %s176 = int_to_ptr.vmem [resolvable:$true] %s175
          %181 = dma.hbm_to_vmem [thread:$0]  %s1, 2048, %s176, [#allocation6], 128, 128, 8
        $region16: #{tpu_custom_call.1} parent=11 // pred_fallthru
          _
        // Predicated region
        $region17: #{tpu_custom_call.1} parent=11 // pred_check
          %p182 = pneg %p86
        $region18: #{tpu_custom_call.1} parent=11 // pred_check_branch
          %184 = sbr.rel (%p182) target = $region20
        $region19: #{tpu_custom_call.1} parent=11 // pred_region
          _
        $region20: #{tpu_custom_call.1} parent=11 // pred_fallthru
          _
        // Predicated region
        $region21: #{tpu_custom_call.1} parent=11 // pred_check
          %p185 = pneg %p107
        $region22: #{tpu_custom_call.1} parent=11 // pred_check_branch
          %187 = sbr.rel (%p185) target = $region24
        $region23: #{tpu_custom_call.1} parent=11 // pred_region
          %s189 = ssub.s32 2048, 2048
          %190 = vsyncadd [#allocation6], %s189
          %s191 = sshll.u32 [#allocation7], 4
          %s192 = int_to_ptr.vmem [resolvable:$true] %s191
          %197 = dma.hbm_to_vmem [thread:$0]  %s3, 2048, %s192, [#allocation6], 128, 128, 8
        $region24: #{tpu_custom_call.1} parent=11 // pred_fallthru
          _
        // Predicated region
        $region25: #{tpu_custom_call.1} parent=11 // pred_check
          %p198 = pneg %p128
        $region26: #{tpu_custom_call.1} parent=11 // pred_check_branch
          %200 = sbr.rel (%p198) target = $region28
        $region27: #{tpu_custom_call.1} parent=11 // pred_region
          _
        $region28: #{tpu_custom_call.1} parent=11 // pred_fallthru
          _
      $region12: #{tpu_custom_call.1} parent=5 // pred_fallthru
        _
      %p201 = scmp.lt.s32.totalorder %s18, 4
      // Predicated region
      $region29: #{tpu_custom_call.1} parent=5 // pred_check
        %p202 = pneg %p201
      $region30: #{tpu_custom_call.1} parent=5 // pred_check_branch
        %204 = sbr.rel (%p202) target = $region32
      $region31: #{tpu_custom_call.1} parent=5 // pred_region
        // Predicated region
        $region33: #{tpu_custom_call.1} parent=31 // pred_check
          %p205 = pneg %p38
        $region34: #{tpu_custom_call.1} parent=31 // pred_check_branch
          %207 = sbr.rel (%p205) target = $region36
        $region35: #{tpu_custom_call.1} parent=31 // pred_region
          %s208 = sand.u32 %s28, 1
          %s209 = scalar_lea.sflag [#allocation3], %s208
          %s210 = sand.u32 %s28, 1
          %s211 = smul.addr %s210, 8
          %s212 = scalar_lea.vmem [#allocation2], %s211
          %s214 = ssub.s32 128, 128
          %215 = vsyncadd %s209, %s214
          %s216 = smul.addr %s18, 128
          %s217 = scalar_lea.hbm %s0, %s216
          %s219 = sshll.u32 %s212, 4
          %s220 = int_to_ptr.vmem [resolvable:$true] %s219
          %222 = dma.hbm_to_vmem [thread:$0]  %s217, 128, %s220, %s209
        $region36: #{tpu_custom_call.1} parent=31 // pred_fallthru
          _
      $region32: #{tpu_custom_call.1} parent=5 // pred_fallthru
        _
      %p223 = scmp.le.s32.totalorder 1, %s18
      %p224 = scmp.lt.s32.totalorder %s18, 5
      %p225 = pnand %p223, %p224
      %p226 = pneg %p225
      // Predicated region
      $region37: #{tpu_custom_call.1} parent=5 // pred_check
        _
      $region38: #{tpu_custom_call.1} parent=5 // pred_check_branch
        %228 = sbr.rel (%p225) target = $region40
      $region39: #{tpu_custom_call.1} parent=5 // pred_region
        %s229 = ssub.s32 %s18, 1
        %s230 = sand.u32 %s31, 1
        %s231 = scalar_lea.sflag [#allocation3], %s230
        %s232 = sand.u32 %s31, 1
        %s233 = smul.addr %s232, 8
        %s234 = scalar_lea.vmem [#allocation2], %s233
        // Predicated region
        $region41: #{tpu_custom_call.1} parent=39 // pred_check
          %p235 = pneg %p44
        $region42: #{tpu_custom_call.1} parent=39 // pred_check_branch
          %237 = sbr.rel (%p235) target = $region44
        $region43: #{tpu_custom_call.1} parent=39 // pred_region
          %238 = dma.done %s231, 128
        $region44: #{tpu_custom_call.1} parent=39 // pred_fallthru
          _
        // Predicated region
        $region45: #{tpu_custom_call.1} parent=39 // pred_check
          %p239 = pneg %p65
        $region46: #{tpu_custom_call.1} parent=39 // pred_check_branch
          %241 = sbr.rel (%p239) target = $region48
        $region47: #{tpu_custom_call.1} parent=39 // pred_region
          %242 = dma.done [#allocation6], 2048
        $region48: #{tpu_custom_call.1} parent=39 // pred_fallthru
          _
        // Predicated region
        $region49: #{tpu_custom_call.1} parent=39 // pred_check
          %p243 = pneg %p107
        $region50: #{tpu_custom_call.1} parent=39 // pred_check_branch
          %245 = sbr.rel (%p243) target = $region52
        $region51: #{tpu_custom_call.1} parent=39 // pred_region
          %246 = dma.done [#allocation6], 2048
        $region52: #{tpu_custom_call.1} parent=39 // pred_fallthru
          _
        %s247 = sand.u32 %s31, 1
        %s248 = scalar_lea.sflag [#allocation3], %s247
        %s249 = sand.u32 %s31, 1
        %s250 = smul.addr %s249, 8
        %s251 = scalar_lea.vmem [#allocation2], %s250
        %p252 = pneg %p44
        %p253 = pneg %p41
        %p254 = pneg %p65
        %p255 = pneg %p62
        %p256 = pneg %p86
        %p257 = pneg %p83
        %p258 = pneg %p107
        %p259 = pneg %p104
        %p260 = pneg %p128
        %p261 = pneg %p125
        %p262 = pneg %p154
        %p263 = pneg %p151
        %s264 = sand.u32 %s141, 1
        %s265 = scalar_lea.sflag [#allocation4], %s264
        %s266 = sand.u32 %s141, 1
        %s267 = smul.addr %s266, 8
        %s268 = scalar_lea.vmem [#allocation8], %s267
        %v269 = vld [vmem:[%s234] sm:$0xff]
        %v270 = vld [vmem:[#allocation5] sm:$0xff]
        %v271 = vld [vmem:[#allocation5 + $0x8] sm:$0xff]
        %v272 = vld [vmem:[#allocation5 + $0x10] sm:$0xff]
        %v273 = vld [vmem:[#allocation5 + $0x18] sm:$0xff]
        %v274 = vld [vmem:[#allocation5 + $0x20] sm:$0xff]
        %v275 = vld [vmem:[#allocation5 + $0x28] sm:$0xff]
        %v276 = vld [vmem:[#allocation5 + $0x30] sm:$0xff]
        %v277 = vld [vmem:[#allocation5 + $0x38] sm:$0xff]
        %v278 = vld [vmem:[#allocation5 + $0x40] sm:$0xff]
        %v279 = vld [vmem:[#allocation5 + $0x48] sm:$0xff]
        %v280 = vld [vmem:[#allocation5 + $0x50] sm:$0xff]
        %v281 = vld [vmem:[#allocation5 + $0x58] sm:$0xff]
        %v282 = vld [vmem:[#allocation5 + $0x60] sm:$0xff]
        %v283 = vld [vmem:[#allocation5 + $0x68] sm:$0xff]
        %v284 = vld [vmem:[#allocation5 + $0x70] sm:$0xff]
        %v285 = vld [vmem:[#allocation5 + $0x78] sm:$0xff]
        %v286 = vld [vmem:[%s2] sm:$0x1]
        %v288 = vlaneseq
        %v289 = vshrl.u32 %v288, 7
        %v290 = vsub.s32 0, %v289
        %v291 = vrot.slane %v286, %v290
        %293 = vmatprep.subr.mxu0 0.0
        %294 = vmatpush1.msra.mxu0 %v270
        %295 = vmatprep.subr.mxu0 0.0
        %296 = vmatpush1.msra.mxu0 %v271
        %297 = vmatprep.subr.mxu0 0.0
        %298 = vmatpush1.msra.mxu0 %v272
        %299 = vmatprep.subr.mxu0 0.0
        %300 = vmatpush1.msra.mxu0 %v273
        %301 = vmatprep.subr.mxu0 0.0
        %302 = vmatpush1.msra.mxu0 %v274
        %303 = vmatprep.subr.mxu0 0.0
        %304 = vmatpush1.msra.mxu0 %v275
        %305 = vmatprep.subr.mxu0 0.0
        %306 = vmatpush1.msra.mxu0 %v276
        %307 = vmatprep.subr.mxu0 0.0
        %308 = vmatpush1.msra.mxu0 %v277
        %309 = vmatprep.subr.mxu0 0.0
        %310 = vmatpush1.msra.mxu0 %v278
        %311 = vmatprep.subr.mxu0 0.0
        %312 = vmatpush1.msra.mxu0 %v279
        %313 = vmatprep.subr.mxu0 0.0
        %314 = vmatpush1.msra.mxu0 %v280
        %315 = vmatprep.subr.mxu0 0.0
        %316 = vmatpush1.msra.mxu0 %v281
        %317 = vmatprep.subr.mxu0 0.0
        %318 = vmatpush1.msra.mxu0 %v282
        %319 = vmatprep.subr.mxu0 0.0
        %320 = vmatpush1.msra.mxu0 %v283
        %321 = vmatprep.subr.mxu0 0.0
        %322 = vmatpush1.msra.mxu0 %v284
        %323 = vmatprep.subr.mxu0 0.0
        %324 = vmatpush1.msra.mxu0 %v285
        %325 = vmatprep.subr.mxu0 0.0
        %326 = vmatpush1.msra.mxu0 0.0
        %327 = vmatprep.subr.mxu0 0.0
        %328 = vmatpush1.msra.mxu0 0.0
        %329 = vmatprep.subr.mxu0 0.0
        %330 = vmatpush1.msra.mxu0 0.0
        %331 = vmatprep.subr.mxu0 0.0
        %332 = vmatpush1.msra.mxu0 0.0
        %333 = vmatprep.subr.mxu0 0.0
        %334 = vmatpush1.msra.mxu0 0.0
        %335 = vmatprep.subr.mxu0 0.0
        %336 = vmatpush1.msra.mxu0 0.0
        %337 = vmatprep.subr.mxu0 0.0
        %338 = vmatpush1.msra.mxu0 0.0
        %339 = vmatprep.subr.mxu0 0.0
        %340 = vmatpush1.msra.mxu0 0.0
        %341 = vmatprep.subr.mxu0 0.0
        %342 = vmatpush1.msra.mxu0 0.0
        %343 = vmatprep.subr.mxu0 0.0
        %344 = vmatpush1.msra.mxu0 0.0
        %345 = vmatprep.subr.mxu0 0.0
        %346 = vmatpush1.msra.mxu0 0.0
        %347 = vmatprep.subr.mxu0 0.0
        %348 = vmatpush1.msra.mxu0 0.0
        %349 = vmatprep.subr.mxu0 0.0
        %350 = vmatpush1.msra.mxu0 0.0
        %351 = vmatprep.subr.mxu0 0.0
        %352 = vmatpush1.msra.mxu0 0.0
        %353 = vmatprep.subr.mxu0 0.0
        %354 = vmatpush1.msra.mxu0 0.0
        %355 = vmatprep.subr.mxu0 0.0
        %356 = vmatpush1.msra.mxu0 0.0
        %357 = vmatprep.mubr.f32.mxu0 0.0
        %358 = vmatmul.mubr.f32.gmra.mrb[0].mxu0 %v269
        %v359 = vpop.f32.mrb[0].mxu0
        %v360 = vadd.f32 %v291, %v359
        %v361 = vpop.f32.mrb[0].mxu0
        %362 = vdwg.mxu0
        %v363 = vmax.f32 %v360, 0.0
        %v364 = vld [vmem:[#allocation7] sm:$0xff]
        %v365 = vld [vmem:[#allocation7 + $0x8] sm:$0xff]
        %v366 = vld [vmem:[#allocation7 + $0x10] sm:$0xff]
        %v367 = vld [vmem:[#allocation7 + $0x18] sm:$0xff]
        %v368 = vld [vmem:[#allocation7 + $0x20] sm:$0xff]
        %v369 = vld [vmem:[#allocation7 + $0x28] sm:$0xff]
        %v370 = vld [vmem:[#allocation7 + $0x30] sm:$0xff]
        %v371 = vld [vmem:[#allocation7 + $0x38] sm:$0xff]
        %v372 = vld [vmem:[#allocation7 + $0x40] sm:$0xff]
        %v373 = vld [vmem:[#allocation7 + $0x48] sm:$0xff]
        %v374 = vld [vmem:[#allocation7 + $0x50] sm:$0xff]
        %v375 = vld [vmem:[#allocation7 + $0x58] sm:$0xff]
        %v376 = vld [vmem:[#allocation7 + $0x60] sm:$0xff]
        %v377 = vld [vmem:[#allocation7 + $0x68] sm:$0xff]
        %v378 = vld [vmem:[#allocation7 + $0x70] sm:$0xff]
        %v379 = vld [vmem:[#allocation7 + $0x78] sm:$0xff]
        %v380 = vld [vmem:[%s4] sm:$0x1]
        %v382 = vlaneseq
        %v383 = vshrl.u32 %v382, 7
        %v384 = vsub.s32 0, %v383
        %v385 = vrot.slane %v380, %v384
        %387 = vmatprep.subr.mxu0 0.0
        %388 = vmatpush1.msra.mxu0 %v364
        %389 = vmatprep.subr.mxu0 0.0
        %390 = vmatpush1.msra.mxu0 %v365
        %391 = vmatprep.subr.mxu0 0.0
        %392 = vmatpush1.msra.mxu0 %v366
        %393 = vmatprep.subr.mxu0 0.0
        %394 = vmatpush1.msra.mxu0 %v367
        %395 = vmatprep.subr.mxu0 0.0
        %396 = vmatpush1.msra.mxu0 %v368
        %397 = vmatprep.subr.mxu0 0.0
        %398 = vmatpush1.msra.mxu0 %v369
        %399 = vmatprep.subr.mxu0 0.0
        %400 = vmatpush1.msra.mxu0 %v370
        %401 = vmatprep.subr.mxu0 0.0
        %402 = vmatpush1.msra.mxu0 %v371
        %403 = vmatprep.subr.mxu0 0.0
        %404 = vmatpush1.msra.mxu0 %v372
        %405 = vmatprep.subr.mxu0 0.0
        %406 = vmatpush1.msra.mxu0 %v373
        %407 = vmatprep.subr.mxu0 0.0
        %408 = vmatpush1.msra.mxu0 %v374
        %409 = vmatprep.subr.mxu0 0.0
        %410 = vmatpush1.msra.mxu0 %v375
        %411 = vmatprep.subr.mxu0 0.0
        %412 = vmatpush1.msra.mxu0 %v376
        %413 = vmatprep.subr.mxu0 0.0
        %414 = vmatpush1.msra.mxu0 %v377
        %415 = vmatprep.subr.mxu0 0.0
        %416 = vmatpush1.msra.mxu0 %v378
        %417 = vmatprep.subr.mxu0 0.0
        %418 = vmatpush1.msra.mxu0 %v379
        %419 = vmatprep.subr.mxu0 0.0
        %420 = vmatpush1.msra.mxu0 0.0
        %421 = vmatprep.subr.mxu0 0.0
        %422 = vmatpush1.msra.mxu0 0.0
        %423 = vmatprep.subr.mxu0 0.0
        %424 = vmatpush1.msra.mxu0 0.0
        %425 = vmatprep.subr.mxu0 0.0
        %426 = vmatpush1.msra.mxu0 0.0
        %427 = vmatprep.subr.mxu0 0.0
        %428 = vmatpush1.msra.mxu0 0.0
        %429 = vmatprep.subr.mxu0 0.0
        %430 = vmatpush1.msra.mxu0 0.0
        %431 = vmatprep.subr.mxu0 0.0
        %432 = vmatpush1.msra.mxu0 0.0
        %433 = vmatprep.subr.mxu0 0.0
        %434 = vmatpush1.msra.mxu0 0.0
        %435 = vmatprep.subr.mxu0 0.0
        %436 = vmatpush1.msra.mxu0 0.0
        %437 = vmatprep.subr.mxu0 0.0
        %438 = vmatpush1.msra.mxu0 0.0
        %439 = vmatprep.subr.mxu0 0.0
        %440 = vmatpush1.msra.mxu0 0.0
        %441 = vmatprep.subr.mxu0 0.0
        %442 = vmatpush1.msra.mxu0 0.0
        %443 = vmatprep.subr.mxu0 0.0
        %444 = vmatpush1.msra.mxu0 0.0
        %445 = vmatprep.subr.mxu0 0.0
        %446 = vmatpush1.msra.mxu0 0.0
        %447 = vmatprep.subr.mxu0 0.0
        %448 = vmatpush1.msra.mxu0 0.0
        %449 = vmatprep.subr.mxu0 0.0
        %450 = vmatpush1.msra.mxu0 0.0
        %451 = vmatprep.mubr.f32.mxu0 0.0
        %452 = vmatmul.mubr.f32.gmra.mrb[0].mxu0 %v363
        %v453 = vpop.f32.mrb[0].mxu0
        %v454 = vadd.f32 %v385, %v453
        %v455 = vpop.f32.mrb[0].mxu0
        %456 = vdwg.mxu0
        %457 = vmax.xlane.f32.xlu0 %v454
        %v458 = vpop.xlane.xlu0 %457
        %v459 = vsub.f32 %v454, %v458
        %v460 = vmul.f32 %v459, 1.442695
        %v461 = vpow.pop %v460
        %462 = vadd.xlane.f32.xlu0 %v461
        %v463 = vpop.xlane.xlu0 %462
        %v464 = vlog2.pop %v463
        %v465 = vmul.f32 %v464, 0.6931472
        %v466 = vsub.f32 %v459, %v465
        %467 = vst [vmem:[%s268] sm:$0xff] %v466
        %s468 = sand.u32 %s141, 1
        %s469 = scalar_lea.sflag [#allocation4], %s468
        %s470 = sand.u32 %s141, 1
        %s471 = smul.addr %s470, 8
        %s472 = scalar_lea.vmem [#allocation8], %s471
        // Predicated region
        $region53: #{tpu_custom_call.1} parent=39 // pred_check
          %p473 = pneg %p151
        $region54: #{tpu_custom_call.1} parent=39 // pred_check_branch
          %475 = sbr.rel (%p473) target = $region56
        $region55: #{tpu_custom_call.1} parent=39 // pred_region
          %s477 = ssub.s32 128, 128
          %478 = vsyncadd %s469, %s477
          %s479 = smul.addr %s23, 128
          %s480 = scalar_lea.hbm %s5, %s479
          %s482 = sshll.u32 %s472, 4
          %s483 = int_to_ptr.vmem [resolvable:$true] %s482
          %485 = dma.vmem_to_hbm [thread:$0]  %s483, 128, %s480, %s469
        $region56: #{tpu_custom_call.1} parent=39 // pred_fallthru
          _
      $region40: #{tpu_custom_call.1} parent=5 // pred_fallthru
        _
      %p486 = scmp.le.s32.totalorder 2, %s18
      // Predicated region
      $region57: #{tpu_custom_call.1} parent=5 // pred_check
        %p487 = pneg %p486
      $region58: #{tpu_custom_call.1} parent=5 // pred_check_branch
        %489 = sbr.rel (%p487) target = $region60
      $region59: #{tpu_custom_call.1} parent=5 // pred_region
        %s490 = ssub.s32 %s18, 2
        // Predicated region
        $region61: #{tpu_custom_call.1} parent=59 // pred_check
          %p491 = pneg %p157
        $region62: #{tpu_custom_call.1} parent=59 // pred_check_branch
          %493 = sbr.rel (%p491) target = $region64
        $region63: #{tpu_custom_call.1} parent=59 // pred_region
          %s494 = sand.u32 %s142, 1
          %s495 = scalar_lea.sflag [#allocation4], %s494
          %s496 = sand.u32 %s142, 1
          %s497 = smul.addr %s496, 8
          %s498 = scalar_lea.vmem [#allocation8], %s497
          %499 = dma.done %s495, 128
        $region64: #{tpu_custom_call.1} parent=59 // pred_fallthru
          _
      $region60: #{tpu_custom_call.1} parent=5 // pred_fallthru
        _
    $region6: #{tpu_custom_call.1} parent=1 // loop_footer
      %s22 = sadd.s32 1, %s18
    $region7: #{tpu_custom_call.1} parent=1 // loop_footer_branch
      %17 = sbr.rel target = $region3
    $region8: #{tpu_custom_call.1} parent=1 // loop_exit
      _
    %500 = vsyncpa [#allocation3], 1
    %s501 = scalar_lea.sflag [#allocation3], 1
    %502 = vsyncpa %s501, 1
    %503 = vsyncpa [#allocation6], 1
    %504 = vsyncpa [#allocation4], 1
    %s505 = scalar_lea.sflag [#allocation4], 1
    %506 = vsyncpa %s505, 1

// kernel: tpu_custom_call.1
$region0: #{tpu_custom_call.1}
  #allocation0 [shape = 'u32[]', space=smem, size = 0x4, offset = 0x4, fixed_abs, tag = 'smem constant byte address 0x4 - core index']
  #allocation1 [shape = 'u32[144,128]{1,0:T(1,128)}', space=vmem, size = 0x12000, scoped, tag = 'internal scratch']
  %s0 = inlined_call_operand.hbm [shape: f32[27,128], index: 0, kind: input, shape index: {}]
  %s1 = inlined_call_operand.hbm [shape: f32[128,128], index: 1, kind: input, shape index: {}]
  %s2 = inlined_call_operand.vmem [shape: f32[1,128], index: 2, kind: input, shape index: {}]
  %s3 = inlined_call_operand.hbm [shape: f32[128,128], index: 3, kind: input, shape index: {}]
  %s4 = inlined_call_operand.vmem [shape: f32[1,128], index: 4, kind: input, shape index: {}]
  %s5 = inlined_call_operand.hbm [shape: f32[27,128], index: 5, kind: output, shape index: {}]
  %s6 = sld [smem:[#allocation0]]
  $region65: #{tpu_custom_call.1} parent=0
    _
  %s8 = ssub.s32 1, %s6
  %s9 = scalar_select 0, %s8, %s6
  $region1: #{tpu_custom_call.1} parent=0
    #allocation2 [shape = 'u8[8192]{0}', space=vmem, size = 0x2000, scoped, tag = 'input window, operand 0']
    #allocation3 [shape = 's32[2]{0}', space=sflag, size = 0x8, scoped, tag = 'scoped memory for tpu_custom_call.1']
    #allocation4 [shape = 's32[2]{0}', space=sflag, size = 0x8, scoped, tag = 'scoped memory for tpu_custom_call.1']
    #allocation5 [shape = 'u8[65536]{0}', space=vmem, size = 0x10000, scoped, tag = 'input window, operand 1, single buffered']
    #allocation6 [shape = 's32[1]{0}', space=sflag, size = 0x4, scoped, tag = 'scoped memory for tpu_custom_call.1']
    #allocation7 [shape = 'u8[65536]{0}', space=vmem, size = 0x10000, scoped, tag = 'input window, operand 3, single buffered']
    #allocation8 [shape = 'u8[8192]{0}', space=vmem, size = 0x2000, scoped, tag = 'output window, operand 0']
    %10 = vsyncpa [#allocation3], 0
    %s11 = scalar_lea.sflag [#allocation3], 1
    %12 = vsyncpa %s11, 0
    %13 = vsyncpa [#allocation6], 0
    %14 = vsyncpa [#allocation4], 0
    %s15 = scalar_lea.sflag [#allocation4], 1
    %16 = vsyncpa %s15, 0
    loop: start=0, step=1, limit=6
    $region2: #{tpu_custom_call.1} parent=1 // loop_pre_header
      _
    $region3: #{tpu_custom_call.1} parent=1 // loop_header
      %s18 = sphi 0, %s22
      %p19 = scmp.ge.s32.totalorder %s18, 6
      %s28 = sphi 0, %s30
      %s31 = sphi 0, %s28
      %s32 = sphi 0, %s31
      %s48 = sphi 0, %s32
      %s52 = sphi 0, %s52
      %s54 = sphi 0, %s52
      %s55 = sphi 0, %s54
      %s69 = sphi 0, %s55
      %s73 = sphi 0, %s73
      %s75 = sphi 0, %s73
      %s76 = sphi 0, %s75
      %s90 = sphi 0, %s76
      %s94 = sphi 0, %s94
      %s96 = sphi 0, %s94
      %s97 = sphi 0, %s96
      %s111 = sphi 0, %s97
      %s115 = sphi 0, %s115
      %s117 = sphi 0, %s115
      %s118 = sphi 0, %s117
      %s132 = sphi 0, %s118
      %s138 = sphi 0, %s140
      %s141 = sphi 0, %s138
      %s142 = sphi 0, %s141
      %s158 = sphi 0, %s142
    $region4: #{tpu_custom_call.1} parent=1 // loop_header_branch
      %21 = sbr.rel (%p19) target = $region8
    $region5: #{tpu_custom_call.1} parent=1 // loop_body
      %s23 = ssub.s32 %s18, 1
      %s24 = ssub.s32 %s18, 2
      %s25 = sadd.s32 %s18, 1
      %s26 = ssub.s32 %s18, %s25
      %p27 = scmp.eq.s32.totalorder %s26, 0
      %s29 = sadd.s32 %s28, 1
      %s30 = scalar_select %p27, %s28, %s29
      %p33 = pneg %p27
      %p34 = scmp.eq.s32.totalorder %s18, 3
      %p35 = por %p33, %p34
      %p36 = scmp.ne.s32.totalorder %s28, %s31
      %p37 = scmp.eq.s32.totalorder %s18, 0
      %p38 = por %p36, %p37
      %p39 = scmp.ne.s32.totalorder %s28, %s31
      %p40 = scmp.eq.s32.totalorder %s23, 3
      %p41 = por %p39, %p40
      %p42 = scmp.ne.s32.totalorder %s31, %s32
      %p43 = scmp.eq.s32.totalorder %s23, 0
      %p44 = por %p42, %p43
      %p45 = scmp.ne.s32.totalorder %s31, %s32
      %p46 = scmp.eq.s32.totalorder %s24, 3
      %p47 = por %p45, %p46
      %p49 = scmp.ne.s32.totalorder %s32, %s48
      %p50 = scmp.eq.s32.totalorder %s24, 0
      %p51 = por %p49, %p50
      %s53 = sadd.s32 %s52, 1
      %p56 = scmp.eq.s32.totalorder %s18, 3
      %p57 = scmp.ne.s32.totalorder %s52, %s54
      %p58 = scmp.eq.s32.totalorder %s18, 0
      %p59 = por %p57, %p58
      %p60 = scmp.ne.s32.totalorder %s52, %s54
      %p61 = scmp.eq.s32.totalorder %s23, 3
      %p62 = por %p60, %p61
      %p63 = scmp.ne.s32.totalorder %s54, %s55
      %p64 = scmp.eq.s32.totalorder %s23, 0
      %p65 = por %p63, %p64
      %p66 = scmp.ne.s32.totalorder %s54, %s55
      %p67 = scmp.eq.s32.totalorder %s24, 3
      %p68 = por %p66, %p67
      %p70 = scmp.ne.s32.totalorder %s55, %s69
      %p71 = scmp.eq.s32.totalorder %s24, 0
      %p72 = por %p70, %p71
      %s74 = sadd.s32 %s73, 1
      %p77 = scmp.eq.s32.totalorder %s18, 3
      %p78 = scmp.ne.s32.totalorder %s73, %s75
      %p79 = scmp.eq.s32.totalorder %s18, 0
      %p80 = por %p78, %p79
      %p81 = scmp.ne.s32.totalorder %s73, %s75
      %p82 = scmp.eq.s32.totalorder %s23, 3
      %p83 = por %p81, %p82
      %p84 = scmp.ne.s32.totalorder %s75, %s76
      %p85 = scmp.eq.s32.totalorder %s23, 0
      %p86 = por %p84, %p85
      %p87 = scmp.ne.s32.totalorder %s75, %s76
      %p88 = scmp.eq.s32.totalorder %s24, 3
      %p89 = por %p87, %p88
      %p91 = scmp.ne.s32.totalorder %s76, %s90
      %p92 = scmp.eq.s32.totalorder %s24, 0
      %p93 = por %p91, %p92
      %s95 = sadd.s32 %s94, 1
      %p98 = scmp.eq.s32.totalorder %s18, 3
      %p99 = scmp.ne.s32.totalorder %s94, %s96
      %p100 = scmp.eq.s32.totalorder %s18, 0
      %p101 = por %p99, %p100
      %p102 = scmp.ne.s32.totalorder %s94, %s96
      %p103 = scmp.eq.s32.totalorder %s23, 3
      %p104 = por %p102, %p103
      %p105 = scmp.ne.s32.totalorder %s96, %s97
      %p106 = scmp.eq.s32.totalorder %s23, 0
      %p107 = por %p105, %p106
      %p108 = scmp.ne.s32.totalorder %s96, %s97
      %p109 = scmp.eq.s32.totalorder %s24, 3
      %p110 = por %p108, %p109
      %p112 = scmp.ne.s32.totalorder %s97, %s111
      %p113 = scmp.eq.s32.totalorder %s24, 0
      %p114 = por %p112, %p113
      %s116 = sadd.s32 %s115, 1
      %p119 = scmp.eq.s32.totalorder %s18, 3
      %p120 = scmp.ne.s32.totalorder %s115, %s117
      %p121 = scmp.eq.s32.totalorder %s18, 0
      %p122 = por %p120, %p121
      %p123 = scmp.ne.s32.totalorder %s115, %s117
      %p124 = scmp.eq.s32.totalorder %s23, 3
      %p125 = por %p123, %p124
      %p126 = scmp.ne.s32.totalorder %s117, %s118
      %p127 = scmp.eq.s32.totalorder %s23, 0
      %p128 = por %p126, %p127
      %p129 = scmp.ne.s32.totalorder %s117, %s118
      %p130 = scmp.eq.s32.totalorder %s24, 3
      %p131 = por %p129, %p130
      %p133 = scmp.ne.s32.totalorder %s118, %s132
      %p134 = scmp.eq.s32.totalorder %s24, 0
      %p135 = por %p133, %p134
      %s136 = ssub.s32 %s18, %s25
      %p137 = scmp.eq.s32.totalorder %s136, 0
      %s139 = sadd.s32 %s138, 1
      %s140 = scalar_select %p137, %s138, %s139
      %p143 = pneg %p137
      %p144 = scmp.eq.s32.totalorder %s18, 3
      %p145 = por %p143, %p144
      %p146 = scmp.ne.s32.totalorder %s138, %s141
      %p147 = scmp.eq.s32.totalorder %s18, 0
      %p148 = por %p146, %p147
      %p149 = scmp.ne.s32.totalorder %s138, %s141
      %p150 = scmp.eq.s32.totalorder %s23, 3
      %p151 = por %p149, %p150
      %p152 = scmp.ne.s32.totalorder %s141, %s142
      %p153 = scmp.eq.s32.totalorder %s23, 0
      %p154 = por %p152, %p153
      %p155 = scmp.ne.s32.totalorder %s141, %s142
      %p156 = scmp.eq.s32.totalorder %s24, 3
      %p157 = por %p155, %p156
      %p159 = scmp.ne.s32.totalorder %s142, %s158
      %p160 = scmp.eq.s32.totalorder %s24, 0
      %p161 = por %p159, %p160
      %p162 = scmp.le.s32.totalorder 1, %s18
      %p163 = scmp.lt.s32.totalorder %s18, 5
      %p164 = pnand %p162, %p163
      %p165 = pneg %p164
      // Predicated region
      $region9: #{tpu_custom_call.1} parent=5 // pred_check
        _
      $region10: #{tpu_custom_call.1} parent=5 // pred_check_branch
        %167 = sbr.rel (%p164) target = $region12
      $region11: #{tpu_custom_call.1} parent=5 // pred_region
        %s168 = ssub.s32 %s18, 1
        // Predicated region
        $region13: #{tpu_custom_call.1} parent=11 // pred_check
          %p169 = pneg %p65
        $region14: #{tpu_custom_call.1} parent=11 // pred_check_branch
          %171 = sbr.rel (%p169) target = $region16
        $region15: #{tpu_custom_call.1} parent=11 // pred_region
          %s173 = ssub.s32 2048, 2048
          %174 = vsyncadd [#allocation6], %s173
          %s175 = sshll.u32 [#allocation5], 4
          %s176 = int_to_ptr.vmem [resolvable:$true] %s175
          %181 = dma.hbm_to_vmem [thread:$0]  %s1, 2048, %s176, [#allocation6], 128, 128, 8
        $region16: #{tpu_custom_call.1} parent=11 // pred_fallthru
          _
        // Predicated region
        $region17: #{tpu_custom_call.1} parent=11 // pred_check
          %p182 = pneg %p86
        $region18: #{tpu_custom_call.1} parent=11 // pred_check_branch
          %184 = sbr.rel (%p182) target = $region20
        $region19: #{tpu_custom_call.1} parent=11 // pred_region
          _
        $region20: #{tpu_custom_call.1} parent=11 // pred_fallthru
          _
        // Predicated region
        $region21: #{tpu_custom_call.1} parent=11 // pred_check
          %p185 = pneg %p107
        $region22: #{tpu_custom_call.1} parent=11 // pred_check_branch
          %187 = sbr.rel (%p185) target = $region24
        $region23: #{tpu_custom_call.1} parent=11 // pred_region
          %s189 = ssub.s32 2048, 2048
          %190 = vsyncadd [#allocation6], %s189
          %s191 = sshll.u32 [#allocation7], 4
          %s192 = int_to_ptr.vmem [resolvable:$true] %s191
          %197 = dma.hbm_to_vmem [thread:$0]  %s3, 2048, %s192, [#allocation6], 128, 128, 8
        $region24: #{tpu_custom_call.1} parent=11 // pred_fallthru
          _
        // Predicated region
        $region25: #{tpu_custom_call.1} parent=11 // pred_check
          %p198 = pneg %p128
        $region26: #{tpu_custom_call.1} parent=11 // pred_check_branch
          %200 = sbr.rel (%p198) target = $region28
        $region27: #{tpu_custom_call.1} parent=11 // pred_region
          _
        $region28: #{tpu_custom_call.1} parent=11 // pred_fallthru
          _
      $region12: #{tpu_custom_call.1} parent=5 // pred_fallthru
        _
      %p201 = scmp.lt.s32.totalorder %s18, 4
      // Predicated region
      $region29: #{tpu_custom_call.1} parent=5 // pred_check
        %p202 = pneg %p201
      $region30: #{tpu_custom_call.1} parent=5 // pred_check_branch
        %204 = sbr.rel (%p202) target = $region32
      $region31: #{tpu_custom_call.1} parent=5 // pred_region
        // Predicated region
        $region33: #{tpu_custom_call.1} parent=31 // pred_check
          %p205 = pneg %p38
        $region34: #{tpu_custom_call.1} parent=31 // pred_check_branch
          %207 = sbr.rel (%p205) target = $region36
        $region35: #{tpu_custom_call.1} parent=31 // pred_region
          %s208 = sand.u32 %s28, 1
          %s209 = scalar_lea.sflag [#allocation3], %s208
          %s210 = sand.u32 %s28, 1
          %s211 = smul.addr %s210, 8
          %s212 = scalar_lea.vmem [#allocation2], %s211
          %s214 = ssub.s32 128, 128
          %215 = vsyncadd %s209, %s214
          %s216 = smul.addr %s18, 128
          %s217 = scalar_lea.hbm %s0, %s216
          %s219 = sshll.u32 %s212, 4
          %s220 = int_to_ptr.vmem [resolvable:$true] %s219
          %222 = dma.hbm_to_vmem [thread:$0]  %s217, 128, %s220, %s209
        $region36: #{tpu_custom_call.1} parent=31 // pred_fallthru
          _
      $region32: #{tpu_custom_call.1} parent=5 // pred_fallthru
        _
      %p223 = scmp.le.s32.totalorder 1, %s18
      %p224 = scmp.lt.s32.totalorder %s18, 5
      %p225 = pnand %p223, %p224
      %p226 = pneg %p225
      // Predicated region
      $region37: #{tpu_custom_call.1} parent=5 // pred_check
        _
      $region38: #{tpu_custom_call.1} parent=5 // pred_check_branch
        %228 = sbr.rel (%p225) target = $region40
      $region39: #{tpu_custom_call.1} parent=5 // pred_region
        %s229 = ssub.s32 %s18, 1
        %s230 = sand.u32 %s31, 1
        %s231 = scalar_lea.sflag [#allocation3], %s230
        %s232 = sand.u32 %s31, 1
        %s233 = smul.addr %s232, 8
        %s234 = scalar_lea.vmem [#allocation2], %s233
        // Predicated region
        $region41: #{tpu_custom_call.1} parent=39 // pred_check
          %p235 = pneg %p44
        $region42: #{tpu_custom_call.1} parent=39 // pred_check_branch
          %237 = sbr.rel (%p235) target = $region44
        $region43: #{tpu_custom_call.1} parent=39 // pred_region
          %238 = dma.done %s231, 128
        $region44: #{tpu_custom_call.1} parent=39 // pred_fallthru
          _
        // Predicated region
        $region45: #{tpu_custom_call.1} parent=39 // pred_check
          %p239 = pneg %p65
        $region46: #{tpu_custom_call.1} parent=39 // pred_check_branch
          %241 = sbr.rel (%p239) target = $region48
        $region47: #{tpu_custom_call.1} parent=39 // pred_region
          %242 = dma.done [#allocation6], 2048
        $region48: #{tpu_custom_call.1} parent=39 // pred_fallthru
          _
        // Predicated region
        $region49: #{tpu_custom_call.1} parent=39 // pred_check
          %p243 = pneg %p107
        $region50: #{tpu_custom_call.1} parent=39 // pred_check_branch
          %245 = sbr.rel (%p243) target = $region52
        $region51: #{tpu_custom_call.1} parent=39 // pred_region
          %246 = dma.done [#allocation6], 2048
        $region52: #{tpu_custom_call.1} parent=39 // pred_fallthru
          _
        %s247 = sand.u32 %s31, 1
        %s248 = scalar_lea.sflag [#allocation3], %s247
        %s249 = sand.u32 %s31, 1
        %s250 = smul.addr %s249, 8
        %s251 = scalar_lea.vmem [#allocation2], %s250
        %p252 = pneg %p44
        %p253 = pneg %p41
        %p254 = pneg %p65
        %p255 = pneg %p62
        %p256 = pneg %p86
        %p257 = pneg %p83
        %p258 = pneg %p107
        %p259 = pneg %p104
        %p260 = pneg %p128
        %p261 = pneg %p125
        %p262 = pneg %p154
        %p263 = pneg %p151
        %s264 = sand.u32 %s141, 1
        %s265 = scalar_lea.sflag [#allocation4], %s264
        %s266 = sand.u32 %s141, 1
        %s267 = smul.addr %s266, 8
        %s268 = scalar_lea.vmem [#allocation8], %s267
        %v269 = vld [vmem:[%s234] sm:$0xff]
        %v270 = vld [vmem:[#allocation5] sm:$0xff]
        %v271 = vld [vmem:[#allocation5 + $0x8] sm:$0xff]
        %v272 = vld [vmem:[#allocation5 + $0x10] sm:$0xff]
        %v273 = vld [vmem:[#allocation5 + $0x18] sm:$0xff]
        %v274 = vld [vmem:[#allocation5 + $0x20] sm:$0xff]
        %v275 = vld [vmem:[#allocation5 + $0x28] sm:$0xff]
        %v276 = vld [vmem:[#allocation5 + $0x30] sm:$0xff]
        %v277 = vld [vmem:[#allocation5 + $0x38] sm:$0xff]
        %v278 = vld [vmem:[#allocation5 + $0x40] sm:$0xff]
        %v279 = vld [vmem:[#allocation5 + $0x48] sm:$0xff]
        %v280 = vld [vmem:[#allocation5 + $0x50] sm:$0xff]
        %v281 = vld [vmem:[#allocation5 + $0x58] sm:$0xff]
        %v282 = vld [vmem:[#allocation5 + $0x60] sm:$0xff]
        %v283 = vld [vmem:[#allocation5 + $0x68] sm:$0xff]
        %v284 = vld [vmem:[#allocation5 + $0x70] sm:$0xff]
        %v285 = vld [vmem:[#allocation5 + $0x78] sm:$0xff]
        %v286 = vld [vmem:[%s2] sm:$0x1]
        %v288 = vlaneseq
        %v289 = vshrl.u32 %v288, 7
        %v290 = vsub.s32 0, %v289
        %v291 = vrot.slane %v286, %v290
        %293 = vmatprep.subr.mxu0 0.0
        %294 = vmatpush1.msra.mxu0 %v270
        %295 = vmatprep.subr.mxu0 0.0
        %296 = vmatpush1.msra.mxu0 %v271
        %297 = vmatprep.subr.mxu0 0.0
        %298 = vmatpush1.msra.mxu0 %v272
        %299 = vmatprep.subr.mxu0 0.0
        %300 = vmatpush1.msra.mxu0 %v273
        %301 = vmatprep.subr.mxu0 0.0
        %302 = vmatpush1.msra.mxu0 %v274
        %303 = vmatprep.subr.mxu0 0.0
        %304 = vmatpush1.msra.mxu0 %v275
        %305 = vmatprep.subr.mxu0 0.0
        %306 = vmatpush1.msra.mxu0 %v276
        %307 = vmatprep.subr.mxu0 0.0
        %308 = vmatpush1.msra.mxu0 %v277
        %309 = vmatprep.subr.mxu0 0.0
        %310 = vmatpush1.msra.mxu0 %v278
        %311 = vmatprep.subr.mxu0 0.0
        %312 = vmatpush1.msra.mxu0 %v279
        %313 = vmatprep.subr.mxu0 0.0
        %314 = vmatpush1.msra.mxu0 %v280
        %315 = vmatprep.subr.mxu0 0.0
        %316 = vmatpush1.msra.mxu0 %v281
        %317 = vmatprep.subr.mxu0 0.0
        %318 = vmatpush1.msra.mxu0 %v282
        %319 = vmatprep.subr.mxu0 0.0
        %320 = vmatpush1.msra.mxu0 %v283
        %321 = vmatprep.subr.mxu0 0.0
        %322 = vmatpush1.msra.mxu0 %v284
        %323 = vmatprep.subr.mxu0 0.0
        %324 = vmatpush1.msra.mxu0 %v285
        %325 = vmatprep.subr.mxu0 0.0
        %326 = vmatpush1.msra.mxu0 0.0
        %327 = vmatprep.subr.mxu0 0.0
        %328 = vmatpush1.msra.mxu0 0.0
        %329 = vmatprep.subr.mxu0 0.0
        %330 = vmatpush1.msra.mxu0 0.0
        %331 = vmatprep.subr.mxu0 0.0
        %332 = vmatpush1.msra.mxu0 0.0
        %333 = vmatprep.subr.mxu0 0.0
        %334 = vmatpush1.msra.mxu0 0.0
        %335 = vmatprep.subr.mxu0 0.0
        %336 = vmatpush1.msra.mxu0 0.0
        %337 = vmatprep.subr.mxu0 0.0
        %338 = vmatpush1.msra.mxu0 0.0
        %339 = vmatprep.subr.mxu0 0.0
        %340 = vmatpush1.msra.mxu0 0.0
        %341 = vmatprep.subr.mxu0 0.0
        %342 = vmatpush1.msra.mxu0 0.0
        %343 = vmatprep.subr.mxu0 0.0
        %344 = vmatpush1.msra.mxu0 0.0
        %345 = vmatprep.subr.mxu0 0.0
        %346 = vmatpush1.msra.mxu0 0.0
        %347 = vmatprep.subr.mxu0 0.0
        %348 = vmatpush1.msra.mxu0 0.0
        %349 = vmatprep.subr.mxu0 0.0
        %350 = vmatpush1.msra.mxu0 0.0
        %351 = vmatprep.subr.mxu0 0.0
        %352 = vmatpush1.msra.mxu0 0.0
        %353 = vmatprep.subr.mxu0 0.0
        %354 = vmatpush1.msra.mxu0 0.0
        %355 = vmatprep.subr.mxu0 0.0
        %356 = vmatpush1.msra.mxu0 0.0
        %357 = vmatprep.mubr.f32.mxu0 0.0
        %358 = vmatmul.mubr.f32.gmra.mrb[0].mxu0 %v269
        %v359 = vpop.f32.mrb[0].mxu0
        %v360 = vadd.f32 %v291, %v359
        %v361 = vpop.f32.mrb[0].mxu0
        %362 = vdwg.mxu0
        %v363 = vmax.f32 %v360, 0.0
        %v364 = vld [vmem:[#allocation7] sm:$0xff]
        %v365 = vld [vmem:[#allocation7 + $0x8] sm:$0xff]
        %v366 = vld [vmem:[#allocation7 + $0x10] sm:$0xff]
        %v367 = vld [vmem:[#allocation7 + $0x18] sm:$0xff]
        %v368 = vld [vmem:[#allocation7 + $0x20] sm:$0xff]
        %v369 = vld [vmem:[#allocation7 + $0x28] sm:$0xff]
        %v370 = vld [vmem:[#allocation7 + $0x30] sm:$0xff]
        %v371 = vld [vmem:[#allocation7 + $0x38] sm:$0xff]
        %v372 = vld [vmem:[#allocation7 + $0x40] sm:$0xff]
        %v373 = vld [vmem:[#allocation7 + $0x48] sm:$0xff]
        %v374 = vld [vmem:[#allocation7 + $0x50] sm:$0xff]
        %v375 = vld [vmem:[#allocation7 + $0x58] sm:$0xff]
        %v376 = vld [vmem:[#allocation7 + $0x60] sm:$0xff]
        %v377 = vld [vmem:[#allocation7 + $0x68] sm:$0xff]
        %v378 = vld [vmem:[#allocation7 + $0x70] sm:$0xff]
        %v379 = vld [vmem:[#allocation7 + $0x78] sm:$0xff]
        %v380 = vld [vmem:[%s4] sm:$0x1]
        %v382 = vlaneseq
        %v383 = vshrl.u32 %v382, 7
        %v384 = vsub.s32 0, %v383
        %v385 = vrot.slane %v380, %v384
        %387 = vmatprep.subr.mxu0 0.0
        %388 = vmatpush1.msra.mxu0 %v364
        %389 = vmatprep.subr.mxu0 0.0
        %390 = vmatpush1.msra.mxu0 %v365
        %391 = vmatprep.subr.mxu0 0.0
        %392 = vmatpush1.msra.mxu0 %v366
        %393 = vmatprep.subr.mxu0 0.0
        %394 = vmatpush1.msra.mxu0 %v367
        %395 = vmatprep.subr.mxu0 0.0
        %396 = vmatpush1.msra.mxu0 %v368
        %397 = vmatprep.subr.mxu0 0.0
        %398 = vmatpush1.msra.mxu0 %v369
        %399 = vmatprep.subr.mxu0 0.0
        %400 = vmatpush1.msra.mxu0 %v370
        %401 = vmatprep.subr.mxu0 0.0
        %402 = vmatpush1.msra.mxu0 %v371
        %403 = vmatprep.subr.mxu0 0.0
        %404 = vmatpush1.msra.mxu0 %v372
        %405 = vmatprep.subr.mxu0 0.0
        %406 = vmatpush1.msra.mxu0 %v373
        %407 = vmatprep.subr.mxu0 0.0
        %408 = vmatpush1.msra.mxu0 %v374
        %409 = vmatprep.subr.mxu0 0.0
        %410 = vmatpush1.msra.mxu0 %v375
        %411 = vmatprep.subr.mxu0 0.0
        %412 = vmatpush1.msra.mxu0 %v376
        %413 = vmatprep.subr.mxu0 0.0
        %414 = vmatpush1.msra.mxu0 %v377
        %415 = vmatprep.subr.mxu0 0.0
        %416 = vmatpush1.msra.mxu0 %v378
        %417 = vmatprep.subr.mxu0 0.0
        %418 = vmatpush1.msra.mxu0 %v379
        %419 = vmatprep.subr.mxu0 0.0
        %420 = vmatpush1.msra.mxu0 0.0
        %421 = vmatprep.subr.mxu0 0.0
        %422 = vmatpush1.msra.mxu0 0.0
        %423 = vmatprep.subr.mxu0 0.0
        %424 = vmatpush1.msra.mxu0 0.0
        %425 = vmatprep.subr.mxu0 0.0
        %426 = vmatpush1.msra.mxu0 0.0
        %427 = vmatprep.subr.mxu0 0.0
        %428 = vmatpush1.msra.mxu0 0.0
        %429 = vmatprep.subr.mxu0 0.0
        %430 = vmatpush1.msra.mxu0 0.0
        %431 = vmatprep.subr.mxu0 0.0
        %432 = vmatpush1.msra.mxu0 0.0
        %433 = vmatprep.subr.mxu0 0.0
        %434 = vmatpush1.msra.mxu0 0.0
        %435 = vmatprep.subr.mxu0 0.0
        %436 = vmatpush1.msra.mxu0 0.0
        %437 = vmatprep.subr.mxu0 0.0
        %438 = vmatpush1.msra.mxu0 0.0
        %439 = vmatprep.subr.mxu0 0.0
        %440 = vmatpush1.msra.mxu0 0.0
        %441 = vmatprep.subr.mxu0 0.0
        %442 = vmatpush1.msra.mxu0 0.0
        %443 = vmatprep.subr.mxu0 0.0
        %444 = vmatpush1.msra.mxu0 0.0
        %445 = vmatprep.subr.mxu0 0.0
        %446 = vmatpush1.msra.mxu0 0.0
        %447 = vmatprep.subr.mxu0 0.0
        %448 = vmatpush1.msra.mxu0 0.0
        %449 = vmatprep.subr.mxu0 0.0
        %450 = vmatpush1.msra.mxu0 0.0
        %451 = vmatprep.mubr.f32.mxu0 0.0
        %452 = vmatmul.mubr.f32.gmra.mrb[0].mxu0 %v363
        %v453 = vpop.f32.mrb[0].mxu0
        %v454 = vadd.f32 %v385, %v453
        %v455 = vpop.f32.mrb[0].mxu0
        %456 = vdwg.mxu0
        %457 = vmax.xlane.f32.xlu0 %v454
        %v458 = vpop.xlane.xlu0 %457
        %v459 = vsub.f32 %v454, %v458
        %v460 = vmul.f32 %v459, 1.442695
        %v461 = vpow.pop %v460
        %462 = vadd.xlane.f32.xlu0 %v461
        %v463 = vpop.xlane.xlu0 %462
        %v464 = vlog2.pop %v463
        %v465 = vmul.f32 %v464, 0.6931472
        %v466 = vsub.f32 %v459, %v465
        %467 = vst [vmem:[%s268] sm:$0xff] %v466
        %s468 = sand.u32 %s141, 1
        %s469 = scalar_lea.sflag [#allocation4], %s468
        %s470 = sand.u32 %s141, 1
        %s471 = smul.addr %s470, 8
        %s472 = scalar_lea.vmem [#allocation8], %s471
        // Predicated region
        $region53: #{tpu_custom_call.1} parent=39 // pred_check
          %p473 = pneg %p151
        $region54: #{tpu_custom_call.1} parent=39 // pred_check_branch
          %475 = sbr.rel (%p473) target = $region56
        $region55: #{tpu_custom_call.1} parent=39 // pred_region
          %s477 = ssub.s32 128, 128
          %478 = vsyncadd %s469, %s477
          %s479 = smul.addr %s23, 128
          %s480 = scalar_lea.hbm %s5, %s479
          %s482 = sshll.u32 %s472, 4
          %s483 = int_to_ptr.vmem [resolvable:$true] %s482
          %485 = dma.vmem_to_hbm [thread:$0]  %s483, 128, %s480, %s469
        $region56: #{tpu_custom_call.1} parent=39 // pred_fallthru
          _
      $region40: #{tpu_custom_call.1} parent=5 // pred_fallthru
        _
      %p486 = scmp.le.s32.totalorder 2, %s18
      // Predicated region
      $region57: #{tpu_custom_call.1} parent=5 // pred_check
        %p487 = pneg %p486
      $region58: #{tpu_custom_call.1} parent=5 // pred_check_branch
        %489 = sbr.rel (%p487) target = $region60
      $region59: #{tpu_custom_call.1} parent=5 // pred_region
        %s490 = ssub.s32 %s18, 2
        // Predicated region
        $region61: #{tpu_custom_call.1} parent=59 // pred_check
          %p491 = pneg %p157
        $region62: #{tpu_custom_call.1} parent=59 // pred_check_branch
          %493 = sbr.rel (%p491) target = $region64
        $region63: #{tpu_custom_call.1} parent=59 // pred_region
          %s494 = sand.u32 %s142, 1
          %s495 = scalar_lea.sflag [#allocation4], %s494
          %s496 = sand.u32 %s142, 1
          %s497 = smul.addr %s496, 8
          %s498 = scalar_lea.vmem [#allocation8], %s497
          %499 = dma.done %s495, 128
        $region64: #{tpu_custom_call.1} parent=59 // pred_fallthru
          _
      $region60: #{tpu_custom_call.1} parent=5 // pred_fallthru
        _
    $region6: #{tpu_custom_call.1} parent=1 // loop_footer
      %s22 = sadd.s32 1, %s18
    $region7: #{tpu_custom_call.1} parent=1 // loop_footer_branch
      %17 = sbr.rel target = $region3
    $region8: #{tpu_custom_call.1} parent=1 // loop_exit
      _
    %500 = vsyncpa [#allocation3], 1
    %s501 = scalar_lea.sflag [#allocation3], 1
    %502 = vsyncpa %s501, 1
    %503 = vsyncpa [#allocation6], 1
    %504 = vsyncpa [#allocation4], 1
    %s505 = scalar_lea.sflag [#allocation4], 1
    %506 = vsyncpa %s505, 1

</llo_original>
